<compile_context>
chip_gen: v6e
topology: v6e:2x2x1
jax: 0.10.0
libtpu: 0.0.40
codegen_flags: <defaults>
</compile_context>

<pallas_src>
import jax
import jax.numpy as jnp
from jax.experimental import pallas as pl
from jax.experimental.pallas import tpu as pltpu


# Below this many elements a standalone pallas_call is pure launch overhead
# (~0.35 us / grid step + a full HBM read+write of x); let XLA fuse instead.
_MIN_PALLAS_ELEMS = 1 << 14

# ~4 MiB per x tile: keeps the fixed per-grid-step cost <10% even at v7x's
# 3.2 TB/s, while double-buffered x-in + x-out (+tiny mask) stays ~16 MiB,
# well inside the 32 MiB scoped limit on every generation.
_TARGET_TILE_BYTES = 4 * 1024 * 1024
_LANE_CAP = 2048                      # max lanes per tile (multiple of 128)
_VMEM_LIMIT_BYTES = 32 * 1024 * 1024


def _sublane_unit(dtype):
    """Native packed sublane granularity: 8 for f32, 16 for bf16, 32 for int8."""
    itemsize = jnp.dtype(dtype).itemsize
    return max(8, 32 // max(itemsize, 1))


def _pick_lane_tile(lane_dim):
    """Largest lane tile: full dim if it fits the cap, else a multiple of 128."""
    if lane_dim <= _LANE_CAP:
        return lane_dim  # full array extent is always a legal block size
    return (_LANE_CAP // 128) * 128


def _pick_sublane_tile(sub_dim, lane_tile, dtype):
    """Sublane tile sized so the x tile is ~_TARGET_TILE_BYTES (dtype-aware)."""
    unit = _sublane_unit(dtype)
    itemsize = jnp.dtype(dtype).itemsize
    budget_rows = max(unit, _TARGET_TILE_BYTES // max(lane_tile * itemsize, 1))
    if sub_dim <= budget_rows:
        return sub_dim  # full extent, always legal
    return max(unit, (budget_rows // unit) * unit)


def _ensure_multi_step(other_steps, sub_dim, sub_tile, unit):
    """If the whole grid collapses to 1 step, halve the sublane tile so both
    v7x TensorCores get work (no-op when already >= 2 steps)."""
    if other_steps * pl.cdiv(sub_dim, sub_tile) >= 2:
        return sub_tile
    half = (sub_tile // 2 // unit) * unit
    return half if half >= unit else sub_tile


def _vd_dropout_kernel(m_ref, x_ref, o_ref):
    # Pure VPU broadcast multiply; mask was pre-cast to x.dtype in the wrapper.
    o_ref[...] = x_ref[...] * m_ref[...]


def _pallas_params(grid, donate_x):
    return dict(
        # x (input index 1) aliases the output only when the caller promises x
        # is donated / dead; otherwise XLA would insert a defensive full copy.
        input_output_aliases=({1: 0} if donate_x else {}),
        compiler_params=pltpu.CompilerParams(
            dimension_semantics=("parallel",) * len(grid),
            vmem_limit_bytes=_VMEM_LIMIT_BYTES,
        ),
    )


def _apply_mask_ncl(x, mask, donate_x):
    # x: (bsz, d, L), mask: (bsz, d, 1). Flatten so the batch folds into the
    # sublane axis: fewer grid steps, bigger contiguous DMAs.
    bsz, d, seq_len = x.shape
    rows = bsz * d
    x2 = x.reshape(rows, seq_len)
    m2 = mask.reshape(rows, 1)

    tl = _pick_lane_tile(seq_len)
    unit = _sublane_unit(x.dtype)
    tr = _pick_sublane_tile(rows, tl, x.dtype)
    tr = _ensure_multi_step(pl.cdiv(seq_len, tl), rows, tr, unit)

    grid = (pl.cdiv(rows, tr), pl.cdiv(seq_len, tl))
    x_spec = pl.BlockSpec((tr, tl), lambda i, j: (i, j))
    # Row-tile index i is the OUTER grid axis, so the (tr, 1) mask block is
    # fetched once per row tile, not once per lane tile.
    m_spec = pl.BlockSpec((tr, 1), lambda i, j: (i, 0))

    out = pl.pallas_call(
        _vd_dropout_kernel,
        out_shape=jax.ShapeDtypeStruct((rows, seq_len), x.dtype),
        grid_spec=pltpu.PrefetchScalarGridSpec(
            num_scalar_prefetch=0,
            grid=grid,
            in_specs=[m_spec, x_spec],
            out_specs=x_spec,
        ),
        **_pallas_params(grid, donate_x),
    )(m2, x2)
    return out.reshape(bsz, d, seq_len)


def _apply_mask_length_first(x, mask, donate_x):
    # x: (bsz, L, d), mask: (bsz, 1, d); d sits on the lane axis. Keep the 3-D
    # grid (mask broadcast is over L within each batch, so rows cannot fold
    # across batches), but put the L-tile index innermost so the (1, td) mask
    # block is DMA'd only when (b, d-tile) changes.
    bsz, seq_len, d = x.shape

    td = _pick_lane_tile(d)
    unit = _sublane_unit(x.dtype)
    tl = _pick_sublane_tile(seq_len, td, x.dtype)
    tl = _ensure_multi_step(bsz * pl.cdiv(d, td), seq_len, tl, unit)

    grid = (bsz, pl.cdiv(d, td), pl.cdiv(seq_len, tl))
    x_spec = pl.BlockSpec((pl.Squeezed(), tl, td), lambda b, j, i: (b, i, j))
    m_spec = pl.BlockSpec((pl.Squeezed(), 1, td), lambda b, j, i: (b, 0, j))

    return pl.pallas_call(
        _vd_dropout_kernel,
        out_shape=jax.ShapeDtypeStruct(x.shape, x.dtype),
        grid_spec=pltpu.PrefetchScalarGridSpec(
            num_scalar_prefetch=0,
            grid=grid,
            in_specs=[m_spec, x_spec],
            out_specs=x_spec,
        ),
        **_pallas_params(grid, donate_x),
    )(mask, x)


class VariationalHidDropout:
    """JAX/Pallas port of the PyTorch VariationalHidDropout module."""

    def __init__(self, dropout=0.0, length_first=False, donate_x=False):
        assert 0.0 <= dropout < 1.0, "dropout must be in [0, 1)"
        self.dropout = dropout
        self.length_first = length_first
        self.donate_x = donate_x  # opt-in in-place update when x is donated
        self.mask = None
        self.training = True

    def reset_mask(self, key, bsz, d, length):
        # Same semantics as torch.zeros(...).bernoulli_(1 - p) / (1 - p),
        # with a deterministic JAX PRNG key instead of torch's global RNG.
        shape = (bsz, 1, d) if self.length_first else (bsz, d, 1)
        keep = jax.random.bernoulli(key, 1.0 - self.dropout, shape)
        self.mask = keep.astype(jnp.float32) / (1.0 - self.dropout)
        return self.mask

    def __call__(self, x):
        if (not self.training) or self.dropout == 0:
            return x
        assert self.mask is not None, (
            "You need to reset mask before using VariationalHidDropout"
        )
        # Pre-cast hoists the per-step VALU cast out of the kernel. (For fp8
        # activations keep the multiply in f32 instead; negligible at bf16.)
        mask = self.mask.astype(x.dtype)
        if x.size < _MIN_PALLAS_ELEMS:
            # Tiny tensors: a standalone kernel launch costs more than it saves;
            # XLA's fused elementwise hits the same HBM roofline.
            return jnp.broadcast_to(mask, x.shape) * x
        if self.length_first:
            return _apply_mask_length_first(x, mask, self.donate_x)
        return _apply_mask_ncl(x, mask, self.donate_x)


if __name__ == "__main__":
    key = jax.random.PRNGKey(0)
    k1, k2, k3, k4, k5, k6 = jax.random.split(key, 6)

    # Case 1: channels-first (bsz, d, L) -> flattened 2-D Pallas path.
    bsz, d, length = 2, 256, 128
    x = jax.random.normal(k1, (bsz, d, length), dtype=jnp.float32)
    drop = VariationalHidDropout(dropout=0.25, length_first=False)
    drop.reset_mask(k2, bsz, d, length)
    out = jax.block_until_ready(drop(x))
    ref = jnp.broadcast_to(drop.mask.astype(x.dtype), x.shape) * x
    assert out.shape == x.shape and out.dtype == x.dtype
    assert jnp.allclose(out, ref, atol=1e-6, rtol=1e-6)

    # Case 2: length-first (bsz, L, d) -> 3-D Pallas path, d on the lane axis.
    bsz2, length2, d2 = 2, 64, 256
    x2 = jax.random.normal(k3, (bsz2, length2, d2), dtype=jnp.float32)
    drop2 = VariationalHidDropout(dropout=0.1, length_first=True)
    drop2.reset_mask(k4, bsz2, d2, length2)
    out2 = jax.block_until_ready(drop2(x2))
    ref2 = jnp.broadcast_to(drop2.mask.astype(x2.dtype), x2.shape) * x2
    assert out2.shape == x2.shape and out2.dtype == x2.dtype
    assert jnp.allclose(out2, ref2, atol=1e-6, rtol=1e-6)

    # Case 3: bf16 + non-128-multiple lane dim (full-extent lane block path).
    bsz3, d3, length3 = 2, 256, 160
    x3 = jax.random.normal(k5, (bsz3, d3, length3), dtype=jnp.bfloat16)
    drop3 = VariationalHidDropout(dropout=0.2, length_first=False)
    drop3.reset_mask(k6, bsz3, d3, length3)
    out3 = jax.block_until_ready(drop3(x3))
    ref3 = jnp.broadcast_to(drop3.mask.astype(x3.dtype), x3.shape) * x3
    assert out3.shape == x3.shape and out3.dtype == x3.dtype
    assert jnp.allclose(out3.astype(jnp.float32), ref3.astype(jnp.float32),
                        atol=1e-2, rtol=1e-2)

    # Case 4: tiny tensor -> plain-jnp fallback path (no kernel launch).
    x4 = jax.random.normal(k5, (2, 32, 8), dtype=jnp.float32)
    drop4 = VariationalHidDropout(dropout=0.25, length_first=False)
    drop4.reset_mask(k2, 2, 32, 8)
    out4 = jax.block_until_ready(drop4(x4))
    ref4 = jnp.broadcast_to(drop4.mask.astype(x4.dtype), x4.shape) * x4
    assert jnp.allclose(out4, ref4, atol=1e-6, rtol=1e-6)

    # Eval-mode / zero-dropout path returns x unchanged (no kernel needed).
    drop.training = False
    assert drop(x) is x

    print("KERNEL_OK")
</pallas_src>

<mosaic_0001>
module attributes {stable_mosaic.version = 11 : i64} {
  func.func @_vd_dropout_kernel(%arg0: i32, %arg1: i32, %arg2: memref<256x1xf32, #tpu.memory_space<vmem>>, %arg3: memref<256x128xf32, #tpu.memory_space<vmem>>, %arg4: memref<256x128xf32, #tpu.memory_space<vmem>>) attributes {dimension_semantics = [#tpu.dimension_semantics<parallel>, #tpu.dimension_semantics<parallel>], iteration_bounds = array<i64: 2, 1>, scalar_prefetch = 0 : i64, scratch_operands = 0 : i64, tpu.core_type = #tpu.core_type<tc>, window_params = [{transform_indices = @transform_0, window_bounds = array<i64: 256, 1>}, {transform_indices = @transform_1, window_bounds = array<i64: 256, 128>}, {transform_indices = @transform_2, window_bounds = array<i64: 256, 128>}]} {
    %c0 = arith.constant 0 : index
    %c0_0 = arith.constant 0 : index
    %0 = vector.load %arg3[%c0, %c0_0] : memref<256x128xf32, #tpu.memory_space<vmem>>, vector<256x128xf32>
    %c0_1 = arith.constant 0 : index
    %c0_2 = arith.constant 0 : index
    %1 = vector.load %arg2[%c0_1, %c0_2] : memref<256x1xf32, #tpu.memory_space<vmem>>, vector<256x1xf32>
    %2 = vector.broadcast %1 : vector<256x1xf32> to vector<256x128xf32>
    %3 = arith.mulf %0, %2 : vector<256x128xf32>
    %c0_3 = arith.constant 0 : index
    %c0_4 = arith.constant 0 : index
    %4 = vector.load %arg4[%c0_3, %c0_4] : memref<256x128xf32, #tpu.memory_space<vmem>>, vector<256x128xf32>
    tpu.vector_store %arg4[%c0_3, %c0_4], %3 {strides = array<i32>} : memref<256x128xf32, #tpu.memory_space<vmem>>, vector<256x128xf32>,
    return
  }
  func.func @transform_0(%arg0: i32, %arg1: i32) -> (i32, i32) {
    %c0_i32 = arith.constant 0 : i32
    %c0_i32_0 = arith.constant 0 : i32
    return %arg0, %c0_i32 : i32, i32
  }
  func.func @transform_1(%arg0: i32, %arg1: i32) -> (i32, i32) {
    %c0_i32 = arith.constant 0 : i32
    return %arg0, %arg1 : i32, i32
  }
  func.func @transform_2(%arg0: i32, %arg1: i32) -> (i32, i32) {
    %c0_i32 = arith.constant 0 : i32
    return %arg0, %arg1 : i32, i32
  }
}

</mosaic_0001>

<llo_original>
// kernel: tpu_custom_call.1
$region0: #{tpu_custom_call.1}
  #allocation0 [shape = 'u32[]', space=smem, size = 0x4, offset = 0x4, fixed_abs, tag = 'smem constant byte address 0x4 - core index']
  #allocation1 [shape = 'u32[144,128]{1,0:T(1,128)}', space=vmem, size = 0x12000, scoped, tag = 'internal scratch']
  %s0 = inlined_call_operand.vmem [shape: f32[512,1], index: 0, kind: input, shape index: {}]
  %s1 = inlined_call_operand.vmem [shape: f32[512,128], index: 1, kind: input, shape index: {}]
  %s2 = inlined_call_operand.hbm [shape: f32[512,128], index: 2, kind: output, shape index: {}]
  %s3 = sld [smem:[#allocation0]]
  $region41: #{tpu_custom_call.1} parent=0
    _
  %s5 = ssub.s32 1, %s3
  %s6 = scalar_select 0, %s5, %s3
  $region1: #{tpu_custom_call.1} parent=0
    #allocation2 [shape = 'u8[262144]{0}', space=vmem, size = 0x40000, scoped, tag = 'output window, operand 0']
    #allocation3 [shape = 's32[2]{0}', space=sflag, size = 0x8, scoped, tag = 'scoped memory for tpu_custom_call.1']
    %7 = vsyncpa [#allocation3], 0
    %s8 = scalar_lea.sflag [#allocation3], 1
    %9 = vsyncpa %s8, 0
    loop: start=0, step=1, limit=4
    $region2: #{tpu_custom_call.1} parent=1 // loop_pre_header
      _
    $region3: #{tpu_custom_call.1} parent=1 // loop_header
      %s11 = sphi 0, %s15
      %p12 = scmp.ge.s32.totalorder %s11, 4
      %s18 = sphi 0, %s30
      %s19 = sphi 0, %s26
      %s20 = sphi 0, %s18
      %s21 = sphi 0, %s19
      %s22 = sphi 0, %s20
      %s23 = sphi 0, %s21
      %s33 = sphi 0, %s35
      %s36 = sphi 0, %s33
      %s37 = sphi 0, %s36
      %s53 = sphi 0, %s37
      %s61 = sphi 0, %s63
      %s64 = sphi 0, %s61
      %s65 = sphi 0, %s64
      %s81 = sphi 0, %s65
      %s89 = sphi 0, %s91
      %s92 = sphi 0, %s89
      %s93 = sphi 0, %s92
      %s109 = sphi 0, %s93
    $region4: #{tpu_custom_call.1} parent=1 // loop_header_branch
      %14 = sbr.rel (%p12) target = $region8
    $region5: #{tpu_custom_call.1} parent=1 // loop_body
      %s16 = ssub.s32 %s11, 1
      %s17 = ssub.s32 %s11, 2
      %s24 = sadd.s32 1, %s19
      %p25 = scmp.ge.s32.totalorder %s24, 1
      %s26 = scalar_select %p25, 0, %s24
      %s27 = sadd.s32 1, %s18
      %s28 = scalar_select %p25, %s27, %s18
      %p29 = scmp.ge.s32.totalorder %s28, 2
      %s30 = scalar_select %p29, 0, %s28
      %s31 = ssub.s32 %s18, %s30
      %p32 = scmp.eq.s32.totalorder %s31, 0
      %s34 = sadd.s32 %s33, 1
      %s35 = scalar_select %p32, %s33, %s34
      %p38 = pneg %p32
      %p39 = scmp.eq.s32.totalorder %s11, 1
      %p40 = por %p38, %p39
      %p41 = scmp.ne.s32.totalorder %s33, %s36
      %p42 = scmp.eq.s32.totalorder %s11, 0
      %p43 = por %p41, %p42
      %p44 = scmp.ne.s32.totalorder %s33, %s36
      %p45 = scmp.eq.s32.totalorder %s16, 1
      %p46 = por %p44, %p45
      %p47 = scmp.ne.s32.totalorder %s36, %s37
      %p48 = scmp.eq.s32.totalorder %s16, 0
      %p49 = por %p47, %p48
      %p50 = scmp.ne.s32.totalorder %s36, %s37
      %p51 = scmp.eq.s32.totalorder %s17, 1
      %p52 = por %p50, %p51
      %p54 = scmp.ne.s32.totalorder %s37, %s53
      %p55 = scmp.eq.s32.totalorder %s17, 0
      %p56 = por %p54, %p55
      %s57 = ssub.s32 %s18, %s30
      %s58 = ssub.s32 %s19, %s26
      %s59 = sor.u32 %s57, %s58
      %p60 = scmp.eq.s32.totalorder %s59, 0
      %s62 = sadd.s32 %s61, 1
      %s63 = scalar_select %p60, %s61, %s62
      %p66 = pneg %p60
      %p67 = scmp.eq.s32.totalorder %s11, 1
      %p68 = por %p66, %p67
      %p69 = scmp.ne.s32.totalorder %s61, %s64
      %p70 = scmp.eq.s32.totalorder %s11, 0
      %p71 = por %p69, %p70
      %p72 = scmp.ne.s32.totalorder %s61, %s64
      %p73 = scmp.eq.s32.totalorder %s16, 1
      %p74 = por %p72, %p73
      %p75 = scmp.ne.s32.totalorder %s64, %s65
      %p76 = scmp.eq.s32.totalorder %s16, 0
      %p77 = por %p75, %p76
      %p78 = scmp.ne.s32.totalorder %s64, %s65
      %p79 = scmp.eq.s32.totalorder %s17, 1
      %p80 = por %p78, %p79
      %p82 = scmp.ne.s32.totalorder %s65, %s81
      %p83 = scmp.eq.s32.totalorder %s17, 0
      %p84 = por %p82, %p83
      %s85 = ssub.s32 %s18, %s30
      %s86 = ssub.s32 %s19, %s26
      %s87 = sor.u32 %s85, %s86
      %p88 = scmp.eq.s32.totalorder %s87, 0
      %s90 = sadd.s32 %s89, 1
      %s91 = scalar_select %p88, %s89, %s90
      %p94 = pneg %p88
      %p95 = scmp.eq.s32.totalorder %s11, 1
      %p96 = por %p94, %p95
      %p97 = scmp.ne.s32.totalorder %s89, %s92
      %p98 = scmp.eq.s32.totalorder %s11, 0
      %p99 = por %p97, %p98
      %p100 = scmp.ne.s32.totalorder %s89, %s92
      %p101 = scmp.eq.s32.totalorder %s16, 1
      %p102 = por %p100, %p101
      %p103 = scmp.ne.s32.totalorder %s92, %s93
      %p104 = scmp.eq.s32.totalorder %s16, 0
      %p105 = por %p103, %p104
      %p106 = scmp.ne.s32.totalorder %s92, %s93
      %p107 = scmp.eq.s32.totalorder %s17, 1
      %p108 = por %p106, %p107
      %p110 = scmp.ne.s32.totalorder %s93, %s109
      %p111 = scmp.eq.s32.totalorder %s17, 0
      %p112 = por %p110, %p111
      %p113 = scmp.le.s32.totalorder 1, %s11
      %p114 = scmp.lt.s32.totalorder %s11, 3
      %p115 = pnand %p113, %p114
      %p116 = pneg %p115
      // Predicated region
      $region9: #{tpu_custom_call.1} parent=5 // pred_check
        _
      $region10: #{tpu_custom_call.1} parent=5 // pred_check_branch
        %118 = sbr.rel (%p115) target = $region12
      $region11: #{tpu_custom_call.1} parent=5 // pred_region
        %s119 = ssub.s32 %s11, 1
      $region12: #{tpu_custom_call.1} parent=5 // pred_fallthru
        _
      %p120 = scmp.lt.s32.totalorder %s11, 2
      // Predicated region
      $region13: #{tpu_custom_call.1} parent=5 // pred_check
        %p121 = pneg %p120
      $region14: #{tpu_custom_call.1} parent=5 // pred_check_branch
        %123 = sbr.rel (%p121) target = $region16
      $region15: #{tpu_custom_call.1} parent=5 // pred_region
        // Predicated region
        $region17: #{tpu_custom_call.1} parent=15 // pred_check
          %p124 = pneg %p43
        $region18: #{tpu_custom_call.1} parent=15 // pred_check_branch
          %126 = sbr.rel (%p124) target = $region20
        $region19: #{tpu_custom_call.1} parent=15 // pred_region
          %s127 = smul.u32 32, %s18
          %p128 = scmp.lt.s32.totalorder %s127, 63
          %s129 = scalar_select %p128, %s127, 63
          %s130 = smul.addr %s129, 8
          %s131 = scalar_lea.vmem %s0, %s130
          %s132 = smul.u32 32, %s18
        $region20: #{tpu_custom_call.1} parent=15 // pred_fallthru
          _
        // Predicated region
        $region21: #{tpu_custom_call.1} parent=15 // pred_check
          %p133 = pneg %p71
        $region22: #{tpu_custom_call.1} parent=15 // pred_check_branch
          %135 = sbr.rel (%p133) target = $region24
        $region23: #{tpu_custom_call.1} parent=15 // pred_region
          %s136 = smul.u32 32, %s18
          %p137 = scmp.lt.s32.totalorder %s136, 63
          %s138 = scalar_select %p137, %s136, 63
          %p139 = scmp.lt.s32.totalorder %s19, 0
          %s140 = scalar_select %p139, %s19, 0
          %s141 = sadd.s32 %s140, %s138
          %s142 = smul.addr %s141, 8
          %s143 = scalar_lea.vmem %s1, %s142
          %s144 = smul.u32 32, %s18
        $region24: #{tpu_custom_call.1} parent=15 // pred_fallthru
          _
      $region16: #{tpu_custom_call.1} parent=5 // pred_fallthru
        _
      %p145 = scmp.le.s32.totalorder 1, %s11
      %p146 = scmp.lt.s32.totalorder %s11, 3
      %p147 = pnand %p145, %p146
      %p148 = pneg %p147
      // Predicated region
      $region25: #{tpu_custom_call.1} parent=5 // pred_check
        _
      $region26: #{tpu_custom_call.1} parent=5 // pred_check_branch
        %150 = sbr.rel (%p147) target = $region28
      $region27: #{tpu_custom_call.1} parent=5 // pred_region
        %s151 = ssub.s32 %s11, 1
        %s152 = smul.u32 32, %s20
        %p153 = scmp.lt.s32.totalorder %s152, 63
        %s154 = scalar_select %p153, %s152, 63
        %s155 = smul.addr %s154, 8
        %s156 = scalar_lea.vmem %s0, %s155
        %p157 = pneg %p49
        %p158 = pneg %p46
        %s159 = smul.u32 32, %s20
        %p160 = scmp.lt.s32.totalorder %s159, 63
        %s161 = scalar_select %p160, %s159, 63
        %p162 = scmp.lt.s32.totalorder %s21, 0
        %s163 = scalar_select %p162, %s21, 0
        %s164 = sadd.s32 %s163, %s161
        %s165 = smul.addr %s164, 8
        %s166 = scalar_lea.vmem %s1, %s165
        %p167 = pneg %p77
        %p168 = pneg %p74
        %p169 = pneg %p105
        %p170 = pneg %p102
        %s171 = sand.u32 %s92, 1
        %s172 = scalar_lea.sflag [#allocation3], %s171
        %s173 = sand.u32 %s92, 1
        %s174 = smul.addr %s173, 256
        %s175 = scalar_lea.vmem [#allocation2], %s174
        %s176 = smul.u32 32, %s20
        %p177 = scmp.lt.s32.totalorder %s176, 63
        %s178 = scalar_select %p177, %s176, 63
        %s179 = smul.addr %s178, 8
        %s180 = scalar_lea.vmem %s0, %s179
        %s181 = smul.u32 32, %s20
        %s182 = smul.u32 32, %s20
        %p183 = scmp.lt.s32.totalorder %s182, 63
        %s184 = scalar_select %p183, %s182, 63
        %p185 = scmp.lt.s32.totalorder %s21, 0
        %s186 = scalar_select %p185, %s21, 0
        %s187 = sadd.s32 %s186, %s184
        %s188 = smul.addr %s187, 8
        %s189 = scalar_lea.vmem %s1, %s188
        %s190 = smul.u32 32, %s20
        %s191 = smul.u32 32, %s20
        %v192 = vld [vmem:[%s189] sm:$0xff]
        %v193 = vld [vmem:[%s189 + $0x8] sm:$0xff]
        %v194 = vld [vmem:[%s189 + $0x10] sm:$0xff]
        %v195 = vld [vmem:[%s189 + $0x18] sm:$0xff]
        %v196 = vld [vmem:[%s189 + $0x20] sm:$0xff]
        %v197 = vld [vmem:[%s189 + $0x28] sm:$0xff]
        %v198 = vld [vmem:[%s189 + $0x30] sm:$0xff]
        %v199 = vld [vmem:[%s189 + $0x38] sm:$0xff]
        %v200 = vld [vmem:[%s189 + $0x40] sm:$0xff]
        %v201 = vld [vmem:[%s189 + $0x48] sm:$0xff]
        %v202 = vld [vmem:[%s189 + $0x50] sm:$0xff]
        %v203 = vld [vmem:[%s189 + $0x58] sm:$0xff]
        %v204 = vld [vmem:[%s189 + $0x60] sm:$0xff]
        %v205 = vld [vmem:[%s189 + $0x68] sm:$0xff]
        %v206 = vld [vmem:[%s189 + $0x70] sm:$0xff]
        %v207 = vld [vmem:[%s189 + $0x78] sm:$0xff]
        %v208 = vld [vmem:[%s189 + $0x80] sm:$0xff]
        %v209 = vld [vmem:[%s189 + $0x88] sm:$0xff]
        %v210 = vld [vmem:[%s189 + $0x90] sm:$0xff]
        %v211 = vld [vmem:[%s189 + $0x98] sm:$0xff]
        %v212 = vld [vmem:[%s189 + $0xa0] sm:$0xff]
        %v213 = vld [vmem:[%s189 + $0xa8] sm:$0xff]
        %v214 = vld [vmem:[%s189 + $0xb0] sm:$0xff]
        %v215 = vld [vmem:[%s189 + $0xb8] sm:$0xff]
        %v216 = vld [vmem:[%s189 + $0xc0] sm:$0xff]
        %v217 = vld [vmem:[%s189 + $0xc8] sm:$0xff]
        %v218 = vld [vmem:[%s189 + $0xd0] sm:$0xff]
        %v219 = vld [vmem:[%s189 + $0xd8] sm:$0xff]
        %v220 = vld [vmem:[%s189 + $0xe0] sm:$0xff]
        %v221 = vld [vmem:[%s189 + $0xe8] sm:$0xff]
        %v222 = vld [vmem:[%s189 + $0xf0] sm:$0xff]
        %v223 = vld [vmem:[%s189 + $0xf8] sm:$0xff]
        %v224 = vld [vmem:[%s180] sm:$0xff]
        %v225 = vld [vmem:[%s180 + $0x8] sm:$0xff]
        %v226 = vld [vmem:[%s180 + $0x10] sm:$0xff]
        %v227 = vld [vmem:[%s180 + $0x18] sm:$0xff]
        %v228 = vld [vmem:[%s180 + $0x20] sm:$0xff]
        %v229 = vld [vmem:[%s180 + $0x28] sm:$0xff]
        %v230 = vld [vmem:[%s180 + $0x30] sm:$0xff]
        %v231 = vld [vmem:[%s180 + $0x38] sm:$0xff]
        %v232 = vld [vmem:[%s180 + $0x40] sm:$0xff]
        %v233 = vld [vmem:[%s180 + $0x48] sm:$0xff]
        %v234 = vld [vmem:[%s180 + $0x50] sm:$0xff]
        %v235 = vld [vmem:[%s180 + $0x58] sm:$0xff]
        %v236 = vld [vmem:[%s180 + $0x60] sm:$0xff]
        %v237 = vld [vmem:[%s180 + $0x68] sm:$0xff]
        %v238 = vld [vmem:[%s180 + $0x70] sm:$0xff]
        %v239 = vld [vmem:[%s180 + $0x78] sm:$0xff]
        %v240 = vld [vmem:[%s180 + $0x80] sm:$0xff]
        %v241 = vld [vmem:[%s180 + $0x88] sm:$0xff]
        %v242 = vld [vmem:[%s180 + $0x90] sm:$0xff]
        %v243 = vld [vmem:[%s180 + $0x98] sm:$0xff]
        %v244 = vld [vmem:[%s180 + $0xa0] sm:$0xff]
        %v245 = vld [vmem:[%s180 + $0xa8] sm:$0xff]
        %v246 = vld [vmem:[%s180 + $0xb0] sm:$0xff]
        %v247 = vld [vmem:[%s180 + $0xb8] sm:$0xff]
        %v248 = vld [vmem:[%s180 + $0xc0] sm:$0xff]
        %v249 = vld [vmem:[%s180 + $0xc8] sm:$0xff]
        %v250 = vld [vmem:[%s180 + $0xd0] sm:$0xff]
        %v251 = vld [vmem:[%s180 + $0xd8] sm:$0xff]
        %v252 = vld [vmem:[%s180 + $0xe0] sm:$0xff]
        %v253 = vld [vmem:[%s180 + $0xe8] sm:$0xff]
        %v254 = vld [vmem:[%s180 + $0xf0] sm:$0xff]
        %v255 = vld [vmem:[%s180 + $0xf8] sm:$0xff]
        %257 = vset.pattern.permute.xlu0 0
        %258 = vperm.xlu0 %257, %v224
        %v259 = vpop.permute.xlu0 %258
        %262 = vset.pattern.permute.xlu0 0
        %263 = vperm.xlu0 %262, %v225
        %v264 = vpop.permute.xlu0 %263
        %267 = vset.pattern.permute.xlu0 0
        %268 = vperm.xlu0 %267, %v226
        %v269 = vpop.permute.xlu0 %268
        %272 = vset.pattern.permute.xlu0 0
        %273 = vperm.xlu0 %272, %v227
        %v274 = vpop.permute.xlu0 %273
        %277 = vset.pattern.permute.xlu0 0
        %278 = vperm.xlu0 %277, %v228
        %v279 = vpop.permute.xlu0 %278
        %282 = vset.pattern.permute.xlu0 0
        %283 = vperm.xlu0 %282, %v229
        %v284 = vpop.permute.xlu0 %283
        %287 = vset.pattern.permute.xlu0 0
        %288 = vperm.xlu0 %287, %v230
        %v289 = vpop.permute.xlu0 %288
        %292 = vset.pattern.permute.xlu0 0
        %293 = vperm.xlu0 %292, %v231
        %v294 = vpop.permute.xlu0 %293
        %297 = vset.pattern.permute.xlu0 0
        %298 = vperm.xlu0 %297, %v232
        %v299 = vpop.permute.xlu0 %298
        %302 = vset.pattern.permute.xlu0 0
        %303 = vperm.xlu0 %302, %v233
        %v304 = vpop.permute.xlu0 %303
        %307 = vset.pattern.permute.xlu0 0
        %308 = vperm.xlu0 %307, %v234
        %v309 = vpop.permute.xlu0 %308
        %312 = vset.pattern.permute.xlu0 0
        %313 = vperm.xlu0 %312, %v235
        %v314 = vpop.permute.xlu0 %313
        %317 = vset.pattern.permute.xlu0 0
        %318 = vperm.xlu0 %317, %v236
        %v319 = vpop.permute.xlu0 %318
        %322 = vset.pattern.permute.xlu0 0
        %323 = vperm.xlu0 %322, %v237
        %v324 = vpop.permute.xlu0 %323
        %327 = vset.pattern.permute.xlu0 0
        %328 = vperm.xlu0 %327, %v238
        %v329 = vpop.permute.xlu0 %328
        %332 = vset.pattern.permute.xlu0 0
        %333 = vperm.xlu0 %332, %v239
        %v334 = vpop.permute.xlu0 %333
        %337 = vset.pattern.permute.xlu0 0
        %338 = vperm.xlu0 %337, %v240
        %v339 = vpop.permute.xlu0 %338
        %342 = vset.pattern.permute.xlu0 0
        %343 = vperm.xlu0 %342, %v241
        %v344 = vpop.permute.xlu0 %343
        %347 = vset.pattern.permute.xlu0 0
        %348 = vperm.xlu0 %347, %v242
        %v349 = vpop.permute.xlu0 %348
        %352 = vset.pattern.permute.xlu0 0
        %353 = vperm.xlu0 %352, %v243
        %v354 = vpop.permute.xlu0 %353
        %357 = vset.pattern.permute.xlu0 0
        %358 = vperm.xlu0 %357, %v244
        %v359 = vpop.permute.xlu0 %358
        %362 = vset.pattern.permute.xlu0 0
        %363 = vperm.xlu0 %362, %v245
        %v364 = vpop.permute.xlu0 %363
        %367 = vset.pattern.permute.xlu0 0
        %368 = vperm.xlu0 %367, %v246
        %v369 = vpop.permute.xlu0 %368
        %372 = vset.pattern.permute.xlu0 0
        %373 = vperm.xlu0 %372, %v247
        %v374 = vpop.permute.xlu0 %373
        %377 = vset.pattern.permute.xlu0 0
        %378 = vperm.xlu0 %377, %v248
        %v379 = vpop.permute.xlu0 %378
        %382 = vset.pattern.permute.xlu0 0
        %383 = vperm.xlu0 %382, %v249
        %v384 = vpop.permute.xlu0 %383
        %387 = vset.pattern.permute.xlu0 0
        %388 = vperm.xlu0 %387, %v250
        %v389 = vpop.permute.xlu0 %388
        %392 = vset.pattern.permute.xlu0 0
        %393 = vperm.xlu0 %392, %v251
        %v394 = vpop.permute.xlu0 %393
        %397 = vset.pattern.permute.xlu0 0
        %398 = vperm.xlu0 %397, %v252
        %v399 = vpop.permute.xlu0 %398
        %402 = vset.pattern.permute.xlu0 0
        %403 = vperm.xlu0 %402, %v253
        %v404 = vpop.permute.xlu0 %403
        %407 = vset.pattern.permute.xlu0 0
        %408 = vperm.xlu0 %407, %v254
        %v409 = vpop.permute.xlu0 %408
        %412 = vset.pattern.permute.xlu0 0
        %413 = vperm.xlu0 %412, %v255
        %v414 = vpop.permute.xlu0 %413
        %v416 = vmul.f32 %v192, %v259
        %v417 = vmul.f32 %v193, %v264
        %v418 = vmul.f32 %v194, %v269
        %v419 = vmul.f32 %v195, %v274
        %v420 = vmul.f32 %v196, %v279
        %v421 = vmul.f32 %v197, %v284
        %v422 = vmul.f32 %v198, %v289
        %v423 = vmul.f32 %v199, %v294
        %v424 = vmul.f32 %v200, %v299
        %v425 = vmul.f32 %v201, %v304
        %v426 = vmul.f32 %v202, %v309
        %v427 = vmul.f32 %v203, %v314
        %v428 = vmul.f32 %v204, %v319
        %v429 = vmul.f32 %v205, %v324
        %v430 = vmul.f32 %v206, %v329
        %v431 = vmul.f32 %v207, %v334
        %v432 = vmul.f32 %v208, %v339
        %v433 = vmul.f32 %v209, %v344
        %v434 = vmul.f32 %v210, %v349
        %v435 = vmul.f32 %v211, %v354
        %v436 = vmul.f32 %v212, %v359
        %v437 = vmul.f32 %v213, %v364
        %v438 = vmul.f32 %v214, %v369
        %v439 = vmul.f32 %v215, %v374
        %v440 = vmul.f32 %v216, %v379
        %v441 = vmul.f32 %v217, %v384
        %v442 = vmul.f32 %v218, %v389
        %v443 = vmul.f32 %v219, %v394
        %v444 = vmul.f32 %v220, %v399
        %v445 = vmul.f32 %v221, %v404
        %v446 = vmul.f32 %v222, %v409
        %v447 = vmul.f32 %v223, %v414
        %448 = vst [vmem:[%s175] sm:$0xff] %v416
        %449 = vst [vmem:[%s175 + $0x8] sm:$0xff] %v417
        %450 = vst [vmem:[%s175 + $0x10] sm:$0xff] %v418
        %451 = vst [vmem:[%s175 + $0x18] sm:$0xff] %v419
        %452 = vst [vmem:[%s175 + $0x20] sm:$0xff] %v420
        %453 = vst [vmem:[%s175 + $0x28] sm:$0xff] %v421
        %454 = vst [vmem:[%s175 + $0x30] sm:$0xff] %v422
        %455 = vst [vmem:[%s175 + $0x38] sm:$0xff] %v423
        %456 = vst [vmem:[%s175 + $0x40] sm:$0xff] %v424
        %457 = vst [vmem:[%s175 + $0x48] sm:$0xff] %v425
        %458 = vst [vmem:[%s175 + $0x50] sm:$0xff] %v426
        %459 = vst [vmem:[%s175 + $0x58] sm:$0xff] %v427
        %460 = vst [vmem:[%s175 + $0x60] sm:$0xff] %v428
        %461 = vst [vmem:[%s175 + $0x68] sm:$0xff] %v429
        %462 = vst [vmem:[%s175 + $0x70] sm:$0xff] %v430
        %463 = vst [vmem:[%s175 + $0x78] sm:$0xff] %v431
        %464 = vst [vmem:[%s175 + $0x80] sm:$0xff] %v432
        %465 = vst [vmem:[%s175 + $0x88] sm:$0xff] %v433
        %466 = vst [vmem:[%s175 + $0x90] sm:$0xff] %v434
        %467 = vst [vmem:[%s175 + $0x98] sm:$0xff] %v435
        %468 = vst [vmem:[%s175 + $0xa0] sm:$0xff] %v436
        %469 = vst [vmem:[%s175 + $0xa8] sm:$0xff] %v437
        %470 = vst [vmem:[%s175 + $0xb0] sm:$0xff] %v438
        %471 = vst [vmem:[%s175 + $0xb8] sm:$0xff] %v439
        %472 = vst [vmem:[%s175 + $0xc0] sm:$0xff] %v440
        %473 = vst [vmem:[%s175 + $0xc8] sm:$0xff] %v441
        %474 = vst [vmem:[%s175 + $0xd0] sm:$0xff] %v442
        %475 = vst [vmem:[%s175 + $0xd8] sm:$0xff] %v443
        %476 = vst [vmem:[%s175 + $0xe0] sm:$0xff] %v444
        %477 = vst [vmem:[%s175 + $0xe8] sm:$0xff] %v445
        %478 = vst [vmem:[%s175 + $0xf0] sm:$0xff] %v446
        %479 = vst [vmem:[%s175 + $0xf8] sm:$0xff] %v447
        %s480 = sand.u32 %s92, 1
        %s481 = scalar_lea.sflag [#allocation3], %s480
        %s482 = sand.u32 %s92, 1
        %s483 = smul.addr %s482, 256
        %s484 = scalar_lea.vmem [#allocation2], %s483
        // Predicated region
        $region29: #{tpu_custom_call.1} parent=27 // pred_check
          %p485 = pneg %p102
        $region30: #{tpu_custom_call.1} parent=27 // pred_check_branch
          %487 = sbr.rel (%p485) target = $region32
        $region31: #{tpu_custom_call.1} parent=27 // pred_region
          %s488 = smul.u32 32, %s20
          %s490 = ssub.s32 4096, 4096
          %491 = vsyncadd %s481, %s490
          %s492 = sadd.s32 %s21, %s488
          %s493 = smul.addr %s492, 128
          %s494 = scalar_lea.hbm %s2, %s493
          %s495 = sshll.u32 %s484, 4
          %s496 = int_to_ptr.vmem [resolvable:$true] %s495
          %501 = dma.vmem_to_hbm [thread:$0]  %s496, 4096, %s494, %s481, 128, 128, 8
        $region32: #{tpu_custom_call.1} parent=27 // pred_fallthru
          _
      $region28: #{tpu_custom_call.1} parent=5 // pred_fallthru
        _
      %p502 = scmp.le.s32.totalorder 2, %s11
      // Predicated region
      $region33: #{tpu_custom_call.1} parent=5 // pred_check
        %p503 = pneg %p502
      $region34: #{tpu_custom_call.1} parent=5 // pred_check_branch
        %505 = sbr.rel (%p503) target = $region36
      $region35: #{tpu_custom_call.1} parent=5 // pred_region
        %s506 = ssub.s32 %s11, 2
        // Predicated region
        $region37: #{tpu_custom_call.1} parent=35 // pred_check
          %p507 = pneg %p108
        $region38: #{tpu_custom_call.1} parent=35 // pred_check_branch
          %509 = sbr.rel (%p507) target = $region40
        $region39: #{tpu_custom_call.1} parent=35 // pred_region
          %s510 = sand.u32 %s93, 1
          %s511 = scalar_lea.sflag [#allocation3], %s510
          %s512 = sand.u32 %s93, 1
          %s513 = smul.addr %s512, 256
          %s514 = scalar_lea.vmem [#allocation2], %s513
          %515 = dma.done %s511, 4096
        $region40: #{tpu_custom_call.1} parent=35 // pred_fallthru
          _
      $region36: #{tpu_custom_call.1} parent=5 // pred_fallthru
        _
    $region6: #{tpu_custom_call.1} parent=1 // loop_footer
      %s15 = sadd.s32 1, %s11
    $region7: #{tpu_custom_call.1} parent=1 // loop_footer_branch
      %10 = sbr.rel target = $region3
    $region8: #{tpu_custom_call.1} parent=1 // loop_exit
      _
    %516 = vsyncpa [#allocation3], 1
    %s517 = scalar_lea.sflag [#allocation3], 1
    %518 = vsyncpa %s517, 1

</llo_original>
